<compile_context>
chip_gen: v7x
topology: tpu7x:2x2x1
jax: 0.10.0
libtpu: 0.0.40
codegen_flags: <defaults>
</compile_context>

<pallas_src>
import jax
import jax.numpy as jnp
from jax import lax
from jax.experimental import pallas as pl
from jax.experimental.pallas import tpu as pltpu


# ----------------------------- Pallas kernels ------------------------------


def _per_batch_matmul_kernel(xp_ref, sp_ref, wmean_ref, weff_ref,
                             mu_ref, gram_ref, diag_ref):
    # xp_ref, sp_ref      : (1, L, P)  patch matrices for batch b (pre-transposed)
    # wmean_ref, weff_ref : (O, P)
    # mu_ref, diag_ref    : (1, O, L) ; gram_ref : (1, L, L)
    dn = (((1,), (1,)), ((), ()))          # contract last dims: A @ B^T (MXU-friendly)
    xp = xp_ref[0]
    sp = sp_ref[0]
    mu_ref[0] = lax.dot_general(
        wmean_ref[...], xp, dn, preferred_element_type=jnp.float32
    ).astype(mu_ref.dtype)
    gram_ref[0] = lax.dot_general(
        xp, xp, dn, preferred_element_type=jnp.float32
    ).astype(gram_ref.dtype)
    diag_ref[0] = lax.dot_general(
        weff_ref[...], sp, dn, preferred_element_type=jnp.float32
    ).astype(diag_ref.dtype)


def _sigma_assemble_kernel(gram_ref, diag_ref, sw_ref, out_ref):
    # gram_ref : (1, L, L) ; diag_ref : (1, O, L) ; sw_ref : (O,) in SMEM
    # out_ref  : (1, 1, L, L)  = sigma_z[b, o]
    o = pl.program_id(1)
    L = gram_ref.shape[-1]
    scale = sw_ref[o]                              # scalar softplus(sigma_weight[o])
    d = diag_ref[0, pl.ds(o, 1), :]                # (1, L)
    ii = lax.broadcasted_iota(jnp.int32, (L, L), 0)
    jj = lax.broadcasted_iota(jnp.int32, (L, L), 1)
    out_ref[0, 0] = (scale * gram_ref[0]
                     + jnp.where(ii == jj, d, jnp.float32(0.0))).astype(out_ref.dtype)


# ------------------------------ JAX wrapper --------------------------------


def _unfold(x, k, stride=1, padding=0, dilation=1):
    """torch.nn.Unfold for a square kernel. Returns ((B, C*k*k, L), (oh, ow))."""
    B, C, H, W = x.shape
    if padding:
        x = jnp.pad(x, ((0, 0), (0, 0), (padding, padding), (padding, padding)))
    Hp, Wp = x.shape[2], x.shape[3]
    oh = (Hp - dilation * (k - 1) - 1) // stride + 1
    ow = (Wp - dilation * (k - 1) - 1) // stride + 1
    cols = []
    for kh in range(k):            # (c, kh, kw) ordering, matching torch.nn.Unfold
        for kw in range(k):
            h0 = kh * dilation
            w0 = kw * dilation
            patch = x[:, :, h0:h0 + (oh - 1) * stride + 1:stride,
                          w0:w0 + (ow - 1) * stride + 1:stride]
            cols.append(patch.reshape(B, C, oh * ow))
    patches = jnp.stack(cols, axis=2)              # (B, C, k*k, L)
    return patches.reshape(B, C * k * k, oh * ow), (oh, ow)


def vdp_conv2d_forward(mu, sigma, w_mean, sigma_weight, *, kernel_size,
                       stride=1, padding=0, dilation=1, input_flag=False):
    """Pallas implementation of VDP_Conv2D.forward (bias=False)."""
    B, C, H, W = mu.shape
    O = w_mean.shape[0]
    k = kernel_size
    assert w_mean.shape == (O, C, k, k)

    x_patches, (oh, ow) = _unfold(mu, k, stride, padding, dilation)     # (B, P, L)
    P = C * k * k
    L = oh * ow

    if input_flag:
        sigma_patches = jnp.zeros_like(x_patches)
    else:
        assert H == W, "module reshapes diag(sigma) to (B, C, H, H)"
        assert sigma.shape == (B, C, H * W, H * W), sigma.shape
        diag_sigma = jnp.diagonal(sigma, axis1=2, axis2=3).reshape(B, C, H, W)
        sigma_patches, _ = _unfold(diag_sigma, k, stride, padding, dilation)

    sw_sp = jnp.log1p(jnp.exp(sigma_weight)).astype(jnp.float32)        # softplus, (O,)
    w_flat = w_mean.reshape(O, P).astype(jnp.float32)
    w_eff = w_flat * w_flat + sw_sp[:, None]                            # (O, P)

    xp_t = jnp.swapaxes(x_patches, 1, 2).astype(jnp.float32)            # (B, L, P)
    sp_t = jnp.swapaxes(sigma_patches, 1, 2).astype(jnp.float32)        # (B, L, P)

    # ---- Kernel A: per-batch MXU matmuls -> mu_z_flat, gram, diag_vals ----
    flops_a = 2 * B * P * L * (2 * O + L)
    bytes_a = 4 * (2 * B * L * P + 2 * O * P + 2 * B * O * L + B * L * L)
    mu_flat, gram, diag_vals = pl.pallas_call(
        _per_batch_matmul_kernel,
        out_shape=(jax.ShapeDtypeStruct((B, O, L), jnp.float32),
                   jax.ShapeDtypeStruct((B, L, L), jnp.float32),
                   jax.ShapeDtypeStruct((B, O, L), jnp.float32)),
        grid=(B,),
        in_specs=[pl.BlockSpec((1, L, P), lambda b: (b, 0, 0)),
                  pl.BlockSpec((1, L, P), lambda b: (b, 0, 0)),
                  pl.BlockSpec((O, P), lambda b: (0, 0)),
                  pl.BlockSpec((O, P), lambda b: (0, 0))],
        out_specs=(pl.BlockSpec((1, O, L), lambda b: (b, 0, 0)),
                   pl.BlockSpec((1, L, L), lambda b: (b, 0, 0)),
                   pl.BlockSpec((1, O, L), lambda b: (b, 0, 0))),
        compiler_params=pltpu.CompilerParams(
            dimension_semantics=("parallel",)),
        cost_estimate=pl.CostEstimate(flops=flops_a, transcendentals=0,
                                      bytes_accessed=bytes_a),
    )(xp_t, sp_t, w_flat, w_eff)

    # ---- Kernel B: sigma_z[b, o] = sw[o] * gram[b] + diag(diag_vals[b, o]) ----
    flops_b = 2 * B * O * L * L
    bytes_b = 4 * (B * L * L + B * O * L + O + B * O * L * L)
    sigma_z = pl.pallas_call(
        _sigma_assemble_kernel,
        out_shape=jax.ShapeDtypeStruct((B, O, L, L), jnp.float32),
        grid=(B, O),
        in_specs=[pl.BlockSpec((1, L, L), lambda b, o: (b, 0, 0)),
                  pl.BlockSpec((1, O, L), lambda b, o: (b, 0, 0)),
                  pl.BlockSpec(memory_space=pltpu.MemorySpace.SMEM)],
        out_specs=pl.BlockSpec((1, 1, L, L), lambda b, o: (b, o, 0, 0)),
        compiler_params=pltpu.CompilerParams(
            dimension_semantics=("parallel", "parallel")),
        cost_estimate=pl.CostEstimate(flops=flops_b, transcendentals=0,
                                      bytes_accessed=bytes_b),
    )(gram, diag_vals, sw_sp)

    mu_z = mu_flat.reshape(B, O, oh, ow)
    return mu_z, sigma_z


# ------------------------- pure-JAX reference (torch port) ------------------


def _reference(mu, sigma, w_mean, sigma_weight, k, stride, padding, dilation):
    B, C, H, W = mu.shape
    O = w_mean.shape[0]
    hp = lax.Precision.HIGHEST
    xp, (oh, ow) = _unfold(mu, k, stride, padding, dilation)            # (B, P, L)
    L = oh * ow
    w_flat = w_mean.reshape(O, -1)
    mu_z = jnp.einsum('op,bpl->bol', w_flat, xp, precision=hp).reshape(B, O, oh, ow)
    x_matrix = jnp.einsum('bpl,bpm->blm', xp, xp, precision=hp)         # (B, L, L)
    sw = jnp.log1p(jnp.exp(sigma_weight))
    sigma_z = sw[None, :, None, None] * x_matrix[:, None, :, :]
    diag_sigma = jnp.diagonal(sigma, axis1=2, axis2=3).reshape(B, C, H, W)
    sp, _ = _unfold(diag_sigma, k, stride, padding, dilation)
    w2 = w_flat * w_flat
    trace = jnp.sum(sp, axis=1)                                         # (B, L)
    mw = (jnp.einsum('op,bpl->bol', w2, sp, precision=hp)
          + sw[None, :, None] * trace[:, None, :])                      # (B, O, L)
    sigma_1 = mw[:, :, :, None] * jnp.eye(L, dtype=mw.dtype)
    return mu_z, sigma_1 + sigma_z


if __name__ == "__main__":
    # Small shapes consistent with the module: kernel 5x5 (int, as forward requires),
    # batch=2, in_channels=4, out_channels=8, spatial 16x16 -> L=144, N=256.
    B, C_in, C_out = 2, 4, 8
    H = W = 16
    k = 5
    N = H * W

    key = jax.random.PRNGKey(0)
    k1, k2, k3, k4 = jax.random.split(key, 4)
    mu = jax.random.normal(k1, (B, C_in, H, W), dtype=jnp.float32)
    sigma = jax.random.normal(k2, (B, C_in, N, N), dtype=jnp.float32)
    # Parameters (mirror PyTorch init: mean ~ N(0, 0.1), sigma_weight ~ -4.5).
    w_mean = 0.1 * jax.random.normal(k3, (C_out, C_in, k, k), dtype=jnp.float32)
    sigma_weight = -4.5 + 0.1 * jax.random.normal(k4, (C_out,), dtype=jnp.float32)

    mu_z, sigma_z = vdp_conv2d_forward(mu, sigma, w_mean, sigma_weight,
                                       kernel_size=k, stride=1, padding=0,
                                       dilation=1, input_flag=False)
    jax.block_until_ready((mu_z, sigma_z))

    mu_ref, sigma_ref = _reference(mu, sigma, w_mean, sigma_weight, k, 1, 0, 1)
    oh = ow = H - k + 1
    L = oh * ow
    assert mu_z.shape == (B, C_out, oh, ow), mu_z.shape
    assert sigma_z.shape == (B, C_out, L, L), sigma_z.shape

    def relerr(a, b):
        return float(jnp.max(jnp.abs(a - b)) / (jnp.max(jnp.abs(b)) + 1e-6))

    assert relerr(mu_z, mu_ref) < 2e-2, ("mu_z mismatch", relerr(mu_z, mu_ref))
    assert relerr(sigma_z, sigma_ref) < 2e-2, ("sigma_z mismatch", relerr(sigma_z, sigma_ref))

    print("KERNEL_OK")
</pallas_src>

<mosaic_0001>
module attributes {stable_mosaic.version = 11 : i64} {
  func.func @_per_batch_matmul_kernel(%arg0: i32, %arg1: memref<1x144x100xf32, #tpu.memory_space<vmem>>, %arg2: memref<1x144x100xf32, #tpu.memory_space<vmem>>, %arg3: memref<8x100xf32, #tpu.memory_space<vmem>>, %arg4: memref<8x100xf32, #tpu.memory_space<vmem>>, %arg5: memref<1x8x144xf32, #tpu.memory_space<vmem>>, %arg6: memref<1x144x144xf32, #tpu.memory_space<vmem>>, %arg7: memref<1x8x144xf32, #tpu.memory_space<vmem>>) attributes {dimension_semantics = [#tpu.dimension_semantics<parallel>], iteration_bounds = array<i64: 2>, scalar_prefetch = 0 : i64, scratch_operands = 0 : i64, tpu.core_type = #tpu.core_type<tc>, window_params = [{transform_indices = @transform_0, window_bounds = array<i64: 1, 144, 100>}, {transform_indices = @transform_1, window_bounds = array<i64: 1, 144, 100>}, {pipeline_mode = #tpu.pipeline_mode<synchronous>, transform_indices = @transform_2, window_bounds = array<i64: 8, 100>}, {pipeline_mode = #tpu.pipeline_mode<synchronous>, transform_indices = @transform_3, window_bounds = array<i64: 8, 100>}, {transform_indices = @transform_4, window_bounds = array<i64: 1, 8, 144>}, {transform_indices = @transform_5, window_bounds = array<i64: 1, 144, 144>}, {transform_indices = @transform_6, window_bounds = array<i64: 1, 8, 144>}]} {
    %c0 = arith.constant 0 : index
    %c0_0 = arith.constant 0 : index
    %c0_1 = arith.constant 0 : index
    %0 = vector.load %arg1[%c0, %c0_0, %c0_1] : memref<1x144x100xf32, #tpu.memory_space<vmem>>, vector<1x144x100xf32>
    %1 = vector.shape_cast %0 : vector<1x144x100xf32> to vector<144x100xf32>
    %c0_2 = arith.constant 0 : index
    %c0_3 = arith.constant 0 : index
    %c0_4 = arith.constant 0 : index
    %2 = vector.load %arg2[%c0_2, %c0_3, %c0_4] : memref<1x144x100xf32, #tpu.memory_space<vmem>>, vector<1x144x100xf32>
    %3 = vector.shape_cast %2 : vector<1x144x100xf32> to vector<144x100xf32>
    %c0_5 = arith.constant 0 : index
    %c0_6 = arith.constant 0 : index
    %4 = vector.load %arg3[%c0_5, %c0_6] : memref<8x100xf32, #tpu.memory_space<vmem>>, vector<8x100xf32>
    %cst = arith.constant dense<0.000000e+00> : vector<8x144xf32>
    %5 = tpu.matmul %4, %1, %cst {dimension_numbers = #tpu.dot_dimension_numbers<[1], [1], [0], [0], [0, 0, 1, 0], [], []>} : vector<8x100xf32>, vector<144x100xf32>, vector<8x144xf32> -> vector<8x144xf32>
    %c0_7 = arith.constant 0 : index
    %c0_8 = arith.constant 0 : index
    %c0_9 = arith.constant 0 : index
    %6 = vector.load %arg5[%c0_7, %c0_8, %c0_9] : memref<1x8x144xf32, #tpu.memory_space<vmem>>, vector<1x8x144xf32>
    %7 = vector.shape_cast %6 : vector<1x8x144xf32> to vector<8x144xf32>
    %8 = vector.shape_cast %5 : vector<8x144xf32> to vector<1x8x144xf32>
    tpu.vector_store %arg5[%c0_7, %c0_8, %c0_9], %8 {strides = array<i32>} : memref<1x8x144xf32, #tpu.memory_space<vmem>>, vector<1x8x144xf32>,
    %cst_10 = arith.constant dense<0.000000e+00> : vector<144x144xf32>
    %9 = tpu.matmul %1, %1, %cst_10 {dimension_numbers = #tpu.dot_dimension_numbers<[1], [1], [0], [0], [0, 0, 1, 0], [], []>} : vector<144x100xf32>, vector<144x100xf32>, vector<144x144xf32> -> vector<144x144xf32>
    %c0_11 = arith.constant 0 : index
    %c0_12 = arith.constant 0 : index
    %c0_13 = arith.constant 0 : index
    %10 = vector.load %arg6[%c0_11, %c0_12, %c0_13] : memref<1x144x144xf32, #tpu.memory_space<vmem>>, vector<1x144x144xf32>
    %11 = vector.shape_cast %10 : vector<1x144x144xf32> to vector<144x144xf32>
    %12 = vector.shape_cast %9 : vector<144x144xf32> to vector<1x144x144xf32>
    tpu.vector_store %arg6[%c0_11, %c0_12, %c0_13], %12 {strides = array<i32>} : memref<1x144x144xf32, #tpu.memory_space<vmem>>, vector<1x144x144xf32>,
    %c0_14 = arith.constant 0 : index
    %c0_15 = arith.constant 0 : index
    %13 = vector.load %arg4[%c0_14, %c0_15] : memref<8x100xf32, #tpu.memory_space<vmem>>, vector<8x100xf32>
    %cst_16 = arith.constant dense<0.000000e+00> : vector<8x144xf32>
    %14 = tpu.matmul %13, %3, %cst_16 {dimension_numbers = #tpu.dot_dimension_numbers<[1], [1], [0], [0], [0, 0, 1, 0], [], []>} : vector<8x100xf32>, vector<144x100xf32>, vector<8x144xf32> -> vector<8x144xf32>
    %c0_17 = arith.constant 0 : index
    %c0_18 = arith.constant 0 : index
    %c0_19 = arith.constant 0 : index
    %15 = vector.load %arg7[%c0_17, %c0_18, %c0_19] : memref<1x8x144xf32, #tpu.memory_space<vmem>>, vector<1x8x144xf32>
    %16 = vector.shape_cast %15 : vector<1x8x144xf32> to vector<8x144xf32>
    %17 = vector.shape_cast %14 : vector<8x144xf32> to vector<1x8x144xf32>
    tpu.vector_store %arg7[%c0_17, %c0_18, %c0_19], %17 {strides = array<i32>} : memref<1x8x144xf32, #tpu.memory_space<vmem>>, vector<1x8x144xf32>,
    return
  }
  func.func @transform_0(%arg0: i32) -> (i32, i32, i32) {
    %c0_i32 = arith.constant 0 : i32
    %c0_i32_0 = arith.constant 0 : i32
    %c0_i32_1 = arith.constant 0 : i32
    return %arg0, %c0_i32, %c0_i32_0 : i32, i32, i32
  }
  func.func @transform_1(%arg0: i32) -> (i32, i32, i32) {
    %c0_i32 = arith.constant 0 : i32
    %c0_i32_0 = arith.constant 0 : i32
    %c0_i32_1 = arith.constant 0 : i32
    return %arg0, %c0_i32, %c0_i32_0 : i32, i32, i32
  }
  func.func @transform_2(%arg0: i32) -> (i32, i32) {
    %c0_i32 = arith.constant 0 : i32
    %c0_i32_0 = arith.constant 0 : i32
    %c0_i32_1 = arith.constant 0 : i32
    return %c0_i32, %c0_i32_0 : i32, i32
  }
  func.func @transform_3(%arg0: i32) -> (i32, i32) {
    %c0_i32 = arith.constant 0 : i32
    %c0_i32_0 = arith.constant 0 : i32
    %c0_i32_1 = arith.constant 0 : i32
    return %c0_i32, %c0_i32_0 : i32, i32
  }
  func.func @transform_4(%arg0: i32) -> (i32, i32, i32) {
    %c0_i32 = arith.constant 0 : i32
    %c0_i32_0 = arith.constant 0 : i32
    %c0_i32_1 = arith.constant 0 : i32
    return %arg0, %c0_i32, %c0_i32_0 : i32, i32, i32
  }
  func.func @transform_5(%arg0: i32) -> (i32, i32, i32) {
    %c0_i32 = arith.constant 0 : i32
    %c0_i32_0 = arith.constant 0 : i32
    %c0_i32_1 = arith.constant 0 : i32
    return %arg0, %c0_i32, %c0_i32_0 : i32, i32, i32
  }
  func.func @transform_6(%arg0: i32) -> (i32, i32, i32) {
    %c0_i32 = arith.constant 0 : i32
    %c0_i32_0 = arith.constant 0 : i32
    %c0_i32_1 = arith.constant 0 : i32
    return %arg0, %c0_i32, %c0_i32_0 : i32, i32, i32
  }
}

</mosaic_0001>

<llo_original>
// kernel: tpu_custom_call.1
$region0: #{tpu_custom_call.1}
  #allocation0 [shape = 'u32[]', space=smem, size = 0x4, offset = 0x4, fixed_abs, tag = 'smem constant byte address 0x4 - core index']
  #allocation1 [shape = 'u32[144,128]{1,0:T(1,128)}', space=vmem, size = 0x12000, scoped, tag = 'internal scratch']
  %s0 = inlined_call_operand.hbm [shape: f32[2,144,100], index: 0, kind: input, shape index: {}]
  %s1 = inlined_call_operand.hbm [shape: f32[2,144,100], index: 1, kind: input, shape index: {}]
  %s2 = inlined_call_operand.hbm [shape: f32[8,100], index: 2, kind: input, shape index: {}]
  %s3 = inlined_call_operand.vmem [shape: f32[8,100], index: 3, kind: input, shape index: {}]
  %s4 = inlined_call_operand.hbm [shape: f32[2,8,144], index: 4, kind: output, shape index: {0}]
  %s5 = inlined_call_operand.hbm [shape: f32[2,144,144], index: 5, kind: output, shape index: {1}]
  %s6 = inlined_call_operand.hbm [shape: f32[2,8,144], index: 6, kind: output, shape index: {2}]
  %7 = xla_tuple %s4, %s5, %s6
  %s8 = sld [smem:[#allocation0]]
  $region77: #{tpu_custom_call.1} parent=0
    _
  %s10 = ssub.s32 1, %s8
  %s11 = scalar_select 0, %s10, %s8
  $region1: #{tpu_custom_call.1} parent=0
    #allocation2 [shape = 'u8[147456]{0}', space=vmem, size = 0x24000, scoped, tag = 'input window, operand 0']
    #allocation3 [shape = 's32[2]{0}', space=sflag, size = 0x8, scoped, tag = 'scoped memory for tpu_custom_call.1']
    #allocation4 [shape = 's32[2]{0}', space=sflag, size = 0x8, scoped, tag = 'scoped memory for tpu_custom_call.1']
    #allocation5 [shape = 'u8[147456]{0}', space=vmem, size = 0x24000, scoped, tag = 'input window, operand 1']
    #allocation6 [shape = 's32[2]{0}', space=sflag, size = 0x8, scoped, tag = 'scoped memory for tpu_custom_call.1']
    #allocation7 [shape = 'u8[4096]{0}', space=vmem, size = 0x1000, scoped, tag = 'input window, operand 2, single buffered']
    #allocation8 [shape = 'u8[16384]{0}', space=vmem, size = 0x4000, scoped, tag = 'output window, operand 0']
    #allocation9 [shape = 'u8[294912]{0}', space=vmem, size = 0x48000, scoped, tag = 'output window, operand 1']
    #allocation10 [shape = 's32[2]{0}', space=sflag, size = 0x8, scoped, tag = 'scoped memory for tpu_custom_call.1']
    #allocation11 [shape = 'u8[16384]{0}', space=vmem, size = 0x4000, scoped, tag = 'output window, operand 2']
    %12 = vsyncpa [#allocation3], 0
    %s13 = scalar_lea.sflag [#allocation3], 1
    %14 = vsyncpa %s13, 0
    %15 = vsyncpa [#allocation6], 0
    %s16 = scalar_lea.sflag [#allocation6], 1
    %17 = vsyncpa %s16, 0
    %18 = vsyncpa [#allocation4], 0
    %s19 = scalar_lea.sflag [#allocation4], 1
    %20 = vsyncpa %s19, 0
    %21 = vsyncpa [#allocation10], 0
    %s22 = scalar_lea.sflag [#allocation10], 1
    %23 = vsyncpa %s22, 0
    loop: start=0, step=1, limit=4
    $region2: #{tpu_custom_call.1} parent=1 // loop_pre_header
      _
    $region3: #{tpu_custom_call.1} parent=1 // loop_header
      %s25 = sphi 0, %s29
      %p26 = scmp.ge.s32.totalorder %s25, 4
      %s35 = sphi 0, %s37
      %s38 = sphi 0, %s35
      %s39 = sphi 0, %s38
      %s55 = sphi 0, %s39
      %s61 = sphi 0, %s63
      %s64 = sphi 0, %s61
      %s65 = sphi 0, %s64
      %s81 = sphi 0, %s65
      %s85 = sphi 0, %s85
      %s87 = sphi 0, %s85
      %s88 = sphi 0, %s87
      %s102 = sphi 0, %s88
      %s106 = sphi 0, %s106
      %s108 = sphi 0, %s106
      %s109 = sphi 0, %s108
      %s123 = sphi 0, %s109
      %s129 = sphi 0, %s131
      %s132 = sphi 0, %s129
      %s133 = sphi 0, %s132
      %s149 = sphi 0, %s133
      %s155 = sphi 0, %s157
      %s158 = sphi 0, %s155
      %s159 = sphi 0, %s158
      %s175 = sphi 0, %s159
      %s181 = sphi 0, %s183
      %s184 = sphi 0, %s181
      %s185 = sphi 0, %s184
      %s201 = sphi 0, %s185
    $region4: #{tpu_custom_call.1} parent=1 // loop_header_branch
      %28 = sbr.rel (%p26) target = $region8
    $region5: #{tpu_custom_call.1} parent=1 // loop_body
      %s30 = ssub.s32 %s25, 1
      %s31 = ssub.s32 %s25, 2
      %s32 = sadd.s32 %s25, 1
      %s33 = ssub.s32 %s25, %s32
      %p34 = scmp.eq.s32.totalorder %s33, 0
      %s36 = sadd.s32 %s35, 1
      %s37 = scalar_select %p34, %s35, %s36
      %p40 = pneg %p34
      %p41 = scmp.eq.s32.totalorder %s25, 1
      %p42 = por %p40, %p41
      %p43 = scmp.ne.s32.totalorder %s35, %s38
      %p44 = scmp.eq.s32.totalorder %s25, 0
      %p45 = por %p43, %p44
      %p46 = scmp.ne.s32.totalorder %s35, %s38
      %p47 = scmp.eq.s32.totalorder %s30, 1
      %p48 = por %p46, %p47
      %p49 = scmp.ne.s32.totalorder %s38, %s39
      %p50 = scmp.eq.s32.totalorder %s30, 0
      %p51 = por %p49, %p50
      %p52 = scmp.ne.s32.totalorder %s38, %s39
      %p53 = scmp.eq.s32.totalorder %s31, 1
      %p54 = por %p52, %p53
      %p56 = scmp.ne.s32.totalorder %s39, %s55
      %p57 = scmp.eq.s32.totalorder %s31, 0
      %p58 = por %p56, %p57
      %s59 = ssub.s32 %s25, %s32
      %p60 = scmp.eq.s32.totalorder %s59, 0
      %s62 = sadd.s32 %s61, 1
      %s63 = scalar_select %p60, %s61, %s62
      %p66 = pneg %p60
      %p67 = scmp.eq.s32.totalorder %s25, 1
      %p68 = por %p66, %p67
      %p69 = scmp.ne.s32.totalorder %s61, %s64
      %p70 = scmp.eq.s32.totalorder %s25, 0
      %p71 = por %p69, %p70
      %p72 = scmp.ne.s32.totalorder %s61, %s64
      %p73 = scmp.eq.s32.totalorder %s30, 1
      %p74 = por %p72, %p73
      %p75 = scmp.ne.s32.totalorder %s64, %s65
      %p76 = scmp.eq.s32.totalorder %s30, 0
      %p77 = por %p75, %p76
      %p78 = scmp.ne.s32.totalorder %s64, %s65
      %p79 = scmp.eq.s32.totalorder %s31, 1
      %p80 = por %p78, %p79
      %p82 = scmp.ne.s32.totalorder %s65, %s81
      %p83 = scmp.eq.s32.totalorder %s31, 0
      %p84 = por %p82, %p83
      %s86 = sadd.s32 %s85, 1
      %p89 = scmp.eq.s32.totalorder %s25, 1
      %p90 = scmp.ne.s32.totalorder %s85, %s87
      %p91 = scmp.eq.s32.totalorder %s25, 0
      %p92 = por %p90, %p91
      %p93 = scmp.ne.s32.totalorder %s85, %s87
      %p94 = scmp.eq.s32.totalorder %s30, 1
      %p95 = por %p93, %p94
      %p96 = scmp.ne.s32.totalorder %s87, %s88
      %p97 = scmp.eq.s32.totalorder %s30, 0
      %p98 = por %p96, %p97
      %p99 = scmp.ne.s32.totalorder %s87, %s88
      %p100 = scmp.eq.s32.totalorder %s31, 1
      %p101 = por %p99, %p100
      %p103 = scmp.ne.s32.totalorder %s88, %s102
      %p104 = scmp.eq.s32.totalorder %s31, 0
      %p105 = por %p103, %p104
      %s107 = sadd.s32 %s106, 1
      %p110 = scmp.eq.s32.totalorder %s25, 1
      %p111 = scmp.ne.s32.totalorder %s106, %s108
      %p112 = scmp.eq.s32.totalorder %s25, 0
      %p113 = por %p111, %p112
      %p114 = scmp.ne.s32.totalorder %s106, %s108
      %p115 = scmp.eq.s32.totalorder %s30, 1
      %p116 = por %p114, %p115
      %p117 = scmp.ne.s32.totalorder %s108, %s109
      %p118 = scmp.eq.s32.totalorder %s30, 0
      %p119 = por %p117, %p118
      %p120 = scmp.ne.s32.totalorder %s108, %s109
      %p121 = scmp.eq.s32.totalorder %s31, 1
      %p122 = por %p120, %p121
      %p124 = scmp.ne.s32.totalorder %s109, %s123
      %p125 = scmp.eq.s32.totalorder %s31, 0
      %p126 = por %p124, %p125
      %s127 = ssub.s32 %s25, %s32
      %p128 = scmp.eq.s32.totalorder %s127, 0
      %s130 = sadd.s32 %s129, 1
      %s131 = scalar_select %p128, %s129, %s130
      %p134 = pneg %p128
      %p135 = scmp.eq.s32.totalorder %s25, 1
      %p136 = por %p134, %p135
      %p137 = scmp.ne.s32.totalorder %s129, %s132
      %p138 = scmp.eq.s32.totalorder %s25, 0
      %p139 = por %p137, %p138
      %p140 = scmp.ne.s32.totalorder %s129, %s132
      %p141 = scmp.eq.s32.totalorder %s30, 1
      %p142 = por %p140, %p141
      %p143 = scmp.ne.s32.totalorder %s132, %s133
      %p144 = scmp.eq.s32.totalorder %s30, 0
      %p145 = por %p143, %p144
      %p146 = scmp.ne.s32.totalorder %s132, %s133
      %p147 = scmp.eq.s32.totalorder %s31, 1
      %p148 = por %p146, %p147
      %p150 = scmp.ne.s32.totalorder %s133, %s149
      %p151 = scmp.eq.s32.totalorder %s31, 0
      %p152 = por %p150, %p151
      %s153 = ssub.s32 %s25, %s32
      %p154 = scmp.eq.s32.totalorder %s153, 0
      %s156 = sadd.s32 %s155, 1
      %s157 = scalar_select %p154, %s155, %s156
      %p160 = pneg %p154
      %p161 = scmp.eq.s32.totalorder %s25, 1
      %p162 = por %p160, %p161
      %p163 = scmp.ne.s32.totalorder %s155, %s158
      %p164 = scmp.eq.s32.totalorder %s25, 0
      %p165 = por %p163, %p164
      %p166 = scmp.ne.s32.totalorder %s155, %s158
      %p167 = scmp.eq.s32.totalorder %s30, 1
      %p168 = por %p166, %p167
      %p169 = scmp.ne.s32.totalorder %s158, %s159
      %p170 = scmp.eq.s32.totalorder %s30, 0
      %p171 = por %p169, %p170
      %p172 = scmp.ne.s32.totalorder %s158, %s159
      %p173 = scmp.eq.s32.totalorder %s31, 1
      %p174 = por %p172, %p173
      %p176 = scmp.ne.s32.totalorder %s159, %s175
      %p177 = scmp.eq.s32.totalorder %s31, 0
      %p178 = por %p176, %p177
      %s179 = ssub.s32 %s25, %s32
      %p180 = scmp.eq.s32.totalorder %s179, 0
      %s182 = sadd.s32 %s181, 1
      %s183 = scalar_select %p180, %s181, %s182
      %p186 = pneg %p180
      %p187 = scmp.eq.s32.totalorder %s25, 1
      %p188 = por %p186, %p187
      %p189 = scmp.ne.s32.totalorder %s181, %s184
      %p190 = scmp.eq.s32.totalorder %s25, 0
      %p191 = por %p189, %p190
      %p192 = scmp.ne.s32.totalorder %s181, %s184
      %p193 = scmp.eq.s32.totalorder %s30, 1
      %p194 = por %p192, %p193
      %p195 = scmp.ne.s32.totalorder %s184, %s185
      %p196 = scmp.eq.s32.totalorder %s30, 0
      %p197 = por %p195, %p196
      %p198 = scmp.ne.s32.totalorder %s184, %s185
      %p199 = scmp.eq.s32.totalorder %s31, 1
      %p200 = por %p198, %p199
      %p202 = scmp.ne.s32.totalorder %s185, %s201
      %p203 = scmp.eq.s32.totalorder %s31, 0
      %p204 = por %p202, %p203
      %p205 = scmp.le.s32.totalorder 1, %s25
      %p206 = scmp.lt.s32.totalorder %s25, 3
      %p207 = pnand %p205, %p206
      %p208 = pneg %p207
      // Predicated region
      $region9: #{tpu_custom_call.1} parent=5 // pred_check
        _
      $region10: #{tpu_custom_call.1} parent=5 // pred_check_branch
        %210 = sbr.rel (%p207) target = $region12
      $region11: #{tpu_custom_call.1} parent=5 // pred_region
        %s211 = ssub.s32 %s25, 1
        // Predicated region
        $region13: #{tpu_custom_call.1} parent=11 // pred_check
          %p212 = pneg %p98
        $region14: #{tpu_custom_call.1} parent=11 // pred_check_branch
          %214 = sbr.rel (%p212) target = $region16
        $region15: #{tpu_custom_call.1} parent=11 // pred_region
          %s216 = ssub.s32 128, 128
          %217 = vsyncadd [#allocation6], %s216
          %s219 = sshll.u32 [#allocation7], 4
          %s220 = int_to_ptr.vmem [resolvable:$true] %s219
          %222 = dma.hbm_to_vmem [thread:$0]  %s2, 128, %s220, [#allocation6]
        $region16: #{tpu_custom_call.1} parent=11 // pred_fallthru
          _
        // Predicated region
        $region17: #{tpu_custom_call.1} parent=11 // pred_check
          %p223 = pneg %p119
        $region18: #{tpu_custom_call.1} parent=11 // pred_check_branch
          %225 = sbr.rel (%p223) target = $region20
        $region19: #{tpu_custom_call.1} parent=11 // pred_region
          _
        $region20: #{tpu_custom_call.1} parent=11 // pred_fallthru
          _
      $region12: #{tpu_custom_call.1} parent=5 // pred_fallthru
        _
      %p226 = scmp.lt.s32.totalorder %s25, 2
      // Predicated region
      $region21: #{tpu_custom_call.1} parent=5 // pred_check
        %p227 = pneg %p226
      $region22: #{tpu_custom_call.1} parent=5 // pred_check_branch
        %229 = sbr.rel (%p227) target = $region24
      $region23: #{tpu_custom_call.1} parent=5 // pred_region
        // Predicated region
        $region25: #{tpu_custom_call.1} parent=23 // pred_check
          %p230 = pneg %p45
        $region26: #{tpu_custom_call.1} parent=23 // pred_check_branch
          %232 = sbr.rel (%p230) target = $region28
        $region27: #{tpu_custom_call.1} parent=23 // pred_region
          %s233 = sand.u32 %s35, 1
          %s234 = scalar_lea.sflag [#allocation3], %s233
          %s235 = sand.u32 %s35, 1
          %s236 = smul.addr %s235, 144
          %s237 = scalar_lea.vmem [#allocation2], %s236
          %s239 = ssub.s32 2304, 2304
          %240 = vsyncadd %s234, %s239
          %s241 = smul.addr %s25, 18
          %s242 = smul.addr %s241, 128
          %s243 = scalar_lea.hbm %s0, %s242
          %s244 = sshll.u32 %s237, 4
          %s245 = int_to_ptr.vmem [resolvable:$true] %s244
          %250 = dma.hbm_to_vmem [thread:$0]  %s243, 2304, %s245, %s234, 128, 128, 8
        $region28: #{tpu_custom_call.1} parent=23 // pred_fallthru
          _
        // Predicated region
        $region29: #{tpu_custom_call.1} parent=23 // pred_check
          %p251 = pneg %p71
        $region30: #{tpu_custom_call.1} parent=23 // pred_check_branch
          %253 = sbr.rel (%p251) target = $region32
        $region31: #{tpu_custom_call.1} parent=23 // pred_region
          %s254 = sand.u32 %s25, 1
          %s255 = scalar_lea.sflag [#allocation6], %s254
          %s256 = sand.u32 %s61, 1
          %s257 = smul.addr %s256, 144
          %s258 = scalar_lea.vmem [#allocation5], %s257
          %s260 = ssub.s32 2304, 2304
          %261 = vsyncadd %s255, %s260
          %s262 = smul.addr %s25, 18
          %s263 = smul.addr %s262, 128
          %s264 = scalar_lea.hbm %s1, %s263
          %s265 = sshll.u32 %s258, 4
          %s266 = int_to_ptr.vmem [resolvable:$true] %s265
          %271 = dma.hbm_to_vmem [thread:$0]  %s264, 2304, %s266, %s255, 128, 128, 8
        $region32: #{tpu_custom_call.1} parent=23 // pred_fallthru
          _
      $region24: #{tpu_custom_call.1} parent=5 // pred_fallthru
        _
      %p272 = scmp.le.s32.totalorder 1, %s25
      %p273 = scmp.lt.s32.totalorder %s25, 3
      %p274 = pnand %p272, %p273
      %p275 = pneg %p274
      // Predicated region
      $region33: #{tpu_custom_call.1} parent=5 // pred_check
        _
      $region34: #{tpu_custom_call.1} parent=5 // pred_check_branch
        %277 = sbr.rel (%p274) target = $region36
      $region35: #{tpu_custom_call.1} parent=5 // pred_region
        %s278 = ssub.s32 %s25, 1
        %s279 = sand.u32 %s38, 1
        %s280 = scalar_lea.sflag [#allocation3], %s279
        %s281 = sand.u32 %s38, 1
        %s282 = smul.addr %s281, 144
        %s283 = scalar_lea.vmem [#allocation2], %s282
        // Predicated region
        $region37: #{tpu_custom_call.1} parent=35 // pred_check
          %p284 = pneg %p51
        $region38: #{tpu_custom_call.1} parent=35 // pred_check_branch
          %286 = sbr.rel (%p284) target = $region40
        $region39: #{tpu_custom_call.1} parent=35 // pred_region
          %287 = dma.done %s280, 2304
        $region40: #{tpu_custom_call.1} parent=35 // pred_fallthru
          _
        %s288 = sand.u32 %s30, 1
        %s289 = scalar_lea.sflag [#allocation6], %s288
        %s290 = sand.u32 %s64, 1
        %s291 = smul.addr %s290, 144
        %s292 = scalar_lea.vmem [#allocation5], %s291
        // Predicated region
        $region41: #{tpu_custom_call.1} parent=35 // pred_check
          %p293 = pneg %p77
        $region42: #{tpu_custom_call.1} parent=35 // pred_check_branch
          %295 = sbr.rel (%p293) target = $region44
        $region43: #{tpu_custom_call.1} parent=35 // pred_region
          %296 = dma.done %s289, 2304
        $region44: #{tpu_custom_call.1} parent=35 // pred_fallthru
          _
        // Predicated region
        $region45: #{tpu_custom_call.1} parent=35 // pred_check
          %p297 = pneg %p98
        $region46: #{tpu_custom_call.1} parent=35 // pred_check_branch
          %299 = sbr.rel (%p297) target = $region48
        $region47: #{tpu_custom_call.1} parent=35 // pred_region
          %300 = dma.done [#allocation6], 128
        $region48: #{tpu_custom_call.1} parent=35 // pred_fallthru
          _
        %s301 = sand.u32 %s38, 1
        %s302 = scalar_lea.sflag [#allocation3], %s301
        %s303 = sand.u32 %s38, 1
        %s304 = smul.addr %s303, 144
        %s305 = scalar_lea.vmem [#allocation2], %s304
        %p306 = pneg %p51
        %p307 = pneg %p48
        %s308 = sand.u32 %s30, 1
        %s309 = scalar_lea.sflag [#allocation6], %s308
        %s310 = sand.u32 %s64, 1
        %s311 = smul.addr %s310, 144
        %s312 = scalar_lea.vmem [#allocation5], %s311
        %p313 = pneg %p77
        %p314 = pneg %p74
        %p315 = pneg %p98
        %p316 = pneg %p95
        %p317 = pneg %p119
        %p318 = pneg %p116
        %p319 = pneg %p145
        %p320 = pneg %p142
        %s321 = sand.u32 %s132, 1
        %s322 = scalar_lea.sflag [#allocation4], %s321
        %s323 = sand.u32 %s132, 1
        %s324 = smul.addr %s323, 16
        %s325 = scalar_lea.vmem [#allocation8], %s324
        %p326 = pneg %p171
        %p327 = pneg %p168
        %s328 = sand.u32 %s30, 1
        %s329 = scalar_lea.sflag [#allocation10], %s328
        %s330 = sand.u32 %s158, 1
        %s331 = smul.addr %s330, 288
        %s332 = scalar_lea.vmem [#allocation9], %s331
        %p333 = pneg %p197
        %p334 = pneg %p194
        %s335 = sand.u32 %s30, 1
        %s336 = scalar_lea.sflag [#allocation10], %s335
        %s337 = sand.u32 %s184, 1
        %s338 = smul.addr %s337, 16
        %s339 = scalar_lea.vmem [#allocation11], %s338
        %v340 = vld [vmem:[%s283] sm:$0xff]
        %v341 = vld [vmem:[%s283 + $0x8] sm:$0xff]
        %v342 = vld [vmem:[%s283 + $0x10] sm:$0xff]
        %v343 = vld [vmem:[%s283 + $0x18] sm:$0xff]
        %v344 = vld [vmem:[%s283 + $0x20] sm:$0xff]
        %v345 = vld [vmem:[%s283 + $0x28] sm:$0xff]
        %v346 = vld [vmem:[%s283 + $0x30] sm:$0xff]
        %v347 = vld [vmem:[%s283 + $0x38] sm:$0xff]
        %v348 = vld [vmem:[%s283 + $0x40] sm:$0xff]
        %v349 = vld [vmem:[%s283 + $0x48] sm:$0xff]
        %v350 = vld [vmem:[%s283 + $0x50] sm:$0xff]
        %v351 = vld [vmem:[%s283 + $0x58] sm:$0xff]
        %v352 = vld [vmem:[%s283 + $0x60] sm:$0xff]
        %v353 = vld [vmem:[%s283 + $0x68] sm:$0xff]
        %v354 = vld [vmem:[%s283 + $0x70] sm:$0xff]
        %v355 = vld [vmem:[%s283 + $0x78] sm:$0xff]
        %v356 = vld [vmem:[%s283 + $0x80] sm:$0xff]
        %v357 = vld [vmem:[%s283 + $0x88] sm:$0xff]
        %v358 = vld [vmem:[%s292] sm:$0xff]
        %v359 = vld [vmem:[%s292 + $0x8] sm:$0xff]
        %v360 = vld [vmem:[%s292 + $0x10] sm:$0xff]
        %v361 = vld [vmem:[%s292 + $0x18] sm:$0xff]
        %v362 = vld [vmem:[%s292 + $0x20] sm:$0xff]
        %v363 = vld [vmem:[%s292 + $0x28] sm:$0xff]
        %v364 = vld [vmem:[%s292 + $0x30] sm:$0xff]
        %v365 = vld [vmem:[%s292 + $0x38] sm:$0xff]
        %v366 = vld [vmem:[%s292 + $0x40] sm:$0xff]
        %v367 = vld [vmem:[%s292 + $0x48] sm:$0xff]
        %v368 = vld [vmem:[%s292 + $0x50] sm:$0xff]
        %v369 = vld [vmem:[%s292 + $0x58] sm:$0xff]
        %v370 = vld [vmem:[%s292 + $0x60] sm:$0xff]
        %v371 = vld [vmem:[%s292 + $0x68] sm:$0xff]
        %v372 = vld [vmem:[%s292 + $0x70] sm:$0xff]
        %v373 = vld [vmem:[%s292 + $0x78] sm:$0xff]
        %v374 = vld [vmem:[%s292 + $0x80] sm:$0xff]
        %v375 = vld [vmem:[%s292 + $0x88] sm:$0xff]
        %v376 = vld [vmem:[#allocation7] sm:$0xff]
        %vm377 = vcmask 818176
        %v379 = vsel %vm377, %v376, 0
        %v382 = vsel %vm377, %v340, 0
        %v385 = vsel %vm377, %v341, 0
        %v388 = vsel %vm377, %v342, 0
        %v391 = vsel %vm377, %v343, 0
        %v394 = vsel %vm377, %v344, 0
        %v397 = vsel %vm377, %v345, 0
        %v400 = vsel %vm377, %v346, 0
        %v403 = vsel %vm377, %v347, 0
        %v406 = vsel %vm377, %v348, 0
        %v409 = vsel %vm377, %v349, 0
        %v412 = vsel %vm377, %v350, 0
        %v415 = vsel %vm377, %v351, 0
        %v418 = vsel %vm377, %v352, 0
        %v421 = vsel %vm377, %v353, 0
        %v424 = vsel %vm377, %v354, 0
        %v427 = vsel %vm377, %v355, 0
        %v430 = vsel %vm377, %v356, 0
        %v433 = vsel %vm377, %v357, 0
        %435 = vmatprep.subr.mxu0 0.0
        %436 = vmatpush1.xpose.msra.mxu0 %v382
        %437 = vmatprep.subr.mxu0 0.0
        %438 = vmatpush1.xpose.msra.mxu0 %v385
        %439 = vmatprep.subr.mxu0 0.0
        %440 = vmatpush1.xpose.msra.mxu0 %v388
        %441 = vmatprep.subr.mxu0 0.0
        %442 = vmatpush1.xpose.msra.mxu0 %v391
        %443 = vmatprep.subr.mxu0 0.0
        %444 = vmatpush1.xpose.msra.mxu0 %v394
        %445 = vmatprep.subr.mxu0 0.0
        %446 = vmatpush1.xpose.msra.mxu0 %v397
        %447 = vmatprep.subr.mxu0 0.0
        %448 = vmatpush1.xpose.msra.mxu0 %v400
        %449 = vmatprep.subr.mxu0 0.0
        %450 = vmatpush1.xpose.msra.mxu0 %v403
        %451 = vmatprep.subr.mxu0 0.0
        %452 = vmatpush1.xpose.msra.mxu0 %v406
        %453 = vmatprep.subr.mxu0 0.0
        %454 = vmatpush1.xpose.msra.mxu0 %v409
        %455 = vmatprep.subr.mxu0 0.0
        %456 = vmatpush1.xpose.msra.mxu0 %v412
        %457 = vmatprep.subr.mxu0 0.0
        %458 = vmatpush1.xpose.msra.mxu0 %v415
        %459 = vmatprep.subr.mxu0 0.0
        %460 = vmatpush1.xpose.msra.mxu0 %v418
        %461 = vmatprep.subr.mxu0 0.0
        %462 = vmatpush1.xpose.msra.mxu0 %v421
        %463 = vmatprep.subr.mxu0 0.0
        %464 = vmatpush1.xpose.msra.mxu0 %v424
        %465 = vmatprep.subr.mxu0 0.0
        %466 = vmatpush1.xpose.msra.mxu0 %v427
        %467 = vmatprep.subr.mxu0 0.0
        %468 = vmatpush1.xpose.msra.mxu0 %v430
        %469 = vmatprep.subr.mxu0 0.0
        %470 = vmatpush1.xpose.msra.mxu0 %v433
        %471 = vmatprep.subr.mxu0 0.0
        %472 = vmatpush1.xpose.msra.mxu0 0.0
        %473 = vmatprep.subr.mxu0 0.0
        %474 = vmatpush1.xpose.msra.mxu0 0.0
        %475 = vmatprep.subr.mxu0 0.0
        %476 = vmatpush1.xpose.msra.mxu0 0.0
        %477 = vmatprep.subr.mxu0 0.0
        %478 = vmatpush1.xpose.msra.mxu0 0.0
        %479 = vmatprep.subr.mxu0 0.0
        %480 = vmatpush1.xpose.msra.mxu0 0.0
        %481 = vmatprep.subr.mxu0 0.0
        %482 = vmatpush1.xpose.msra.mxu0 0.0
        %483 = vmatprep.subr.mxu0 0.0
        %484 = vmatpush1.xpose.msra.mxu0 0.0
        %485 = vmatprep.subr.mxu0 0.0
        %486 = vmatpush1.xpose.msra.mxu0 0.0
        %487 = vmatprep.subr.mxu0 0.0
        %488 = vmatpush1.xpose.msra.mxu0 0.0
        %489 = vmatprep.subr.mxu0 0.0
        %490 = vmatpush1.xpose.msra.mxu0 0.0
        %491 = vmatprep.subr.mxu0 0.0
        %492 = vmatpush1.xpose.msra.mxu0 0.0
        %493 = vmatprep.subr.mxu0 0.0
        %494 = vmatpush1.xpose.msra.mxu0 0.0
        %495 = vmatprep.subr.mxu0 0.0
        %496 = vmatpush1.xpose.msra.mxu0 0.0
        %497 = vmatprep.subr.mxu0 0.0
        %498 = vmatpush1.xpose.msra.mxu0 0.0
        %499 = vmatprep.mubr.f32.mxu0 0.0
        %500 = vmatmul.mubr.f32.gmra.mrb[0].mxu0 %v379
        %v501 = vpop.f32.mrb[0].mxu0
        %v502 = vadd.f32 0.0, %v501
        %v503 = vpop.f32.mrb[0].mxu0
        %v504 = vadd.f32 0.0, %v503
        %505 = vdwg.mxu0
        %506 = vst [vmem:[%s325] sm:$0xff] %v502
        %vm507 = vcmask 130048
        %508 = vst.msk [vmem:[%s325 + $0x8] sm:$0xff] %vm507, %v504
        %509 = vmatprep.subr.mxu0 0.0
        %510 = vmatpush1.xpose.msra.mxu0 %v382
        %511 = vmatprep.subr.mxu0 0.0
        %512 = vmatpush1.xpose.msra.mxu0 %v385
        %513 = vmatprep.subr.mxu0 0.0
        %514 = vmatpush1.xpose.msra.mxu0 %v388
        %515 = vmatprep.subr.mxu0 0.0
        %516 = vmatpush1.xpose.msra.mxu0 %v391
        %517 = vmatprep.subr.mxu0 0.0
        %518 = vmatpush1.xpose.msra.mxu0 %v394
        %519 = vmatprep.subr.mxu0 0.0
        %520 = vmatpush1.xpose.msra.mxu0 %v397
        %521 = vmatprep.subr.mxu0 0.0
        %522 = vmatpush1.xpose.msra.mxu0 %v400
        %523 = vmatprep.subr.mxu0 0.0
        %524 = vmatpush1.xpose.msra.mxu0 %v403
        %525 = vmatprep.subr.mxu0 0.0
        %526 = vmatpush1.xpose.msra.mxu0 %v406
        %527 = vmatprep.subr.mxu0 0.0
        %528 = vmatpush1.xpose.msra.mxu0 %v409
        %529 = vmatprep.subr.mxu0 0.0
        %530 = vmatpush1.xpose.msra.mxu0 %v412
        %531 = vmatprep.subr.mxu0 0.0
        %532 = vmatpush1.xpose.msra.mxu0 %v415
        %533 = vmatprep.subr.mxu0 0.0
        %534 = vmatpush1.xpose.msra.mxu0 %v418
        %535 = vmatprep.subr.mxu0 0.0
        %536 = vmatpush1.xpose.msra.mxu0 %v421
        %537 = vmatprep.subr.mxu0 0.0
        %538 = vmatpush1.xpose.msra.mxu0 %v424
        %539 = vmatprep.subr.mxu0 0.0
        %540 = vmatpush1.xpose.msra.mxu0 %v427
        %541 = vmatprep.subr.mxu0 0.0
        %542 = vmatpush1.xpose.msra.mxu0 %v430
        %543 = vmatprep.subr.mxu0 0.0
        %544 = vmatpush1.xpose.msra.mxu0 %v433
        %545 = vmatprep.subr.mxu0 0.0
        %546 = vmatpush1.xpose.msra.mxu0 0.0
        %547 = vmatprep.subr.mxu0 0.0
        %548 = vmatpush1.xpose.msra.mxu0 0.0
        %549 = vmatprep.subr.mxu0 0.0
        %550 = vmatpush1.xpose.msra.mxu0 0.0
        %551 = vmatprep.subr.mxu0 0.0
        %552 = vmatpush1.xpose.msra.mxu0 0.0
        %553 = vmatprep.subr.mxu0 0.0
        %554 = vmatpush1.xpose.msra.mxu0 0.0
        %555 = vmatprep.subr.mxu0 0.0
        %556 = vmatpush1.xpose.msra.mxu0 0.0
        %557 = vmatprep.subr.mxu0 0.0
        %558 = vmatpush1.xpose.msra.mxu0 0.0
        %559 = vmatprep.subr.mxu0 0.0
        %560 = vmatpush1.xpose.msra.mxu0 0.0
        %561 = vmatprep.subr.mxu0 0.0
        %562 = vmatpush1.xpose.msra.mxu0 0.0
        %563 = vmatprep.subr.mxu0 0.0
        %564 = vmatpush1.xpose.msra.mxu0 0.0
        %565 = vmatprep.subr.mxu0 0.0
        %566 = vmatpush1.xpose.msra.mxu0 0.0
        %567 = vmatprep.subr.mxu0 0.0
        %568 = vmatpush1.xpose.msra.mxu0 0.0
        %569 = vmatprep.subr.mxu0 0.0
        %570 = vmatpush1.xpose.msra.mxu0 0.0
        %571 = vmatprep.subr.mxu0 0.0
        %572 = vmatpush1.xpose.msra.mxu0 0.0
        %573 = vmatprep.mubr.f32.mxu0 0.0
        %574 = vmatmul.mubr.f32.gmra.mrb[0].mxu0 %v382
        %v575 = vpop.f32.mrb[0].mxu0
        %v576 = vadd.f32 0.0, %v575
        %v577 = vpop.f32.mrb[0].mxu0
        %v578 = vadd.f32 0.0, %v577
        %579 = vmatprep.mubr.f32.mxu0 0.0
        %580 = vmatmul.mubr.f32.gmra.mrb[0].mxu0 %v385
        %v581 = vpop.f32.mrb[0].mxu0
        %v582 = vadd.f32 0.0, %v581
        %v583 = vpop.f32.mrb[0].mxu0
        %v584 = vadd.f32 0.0, %v583
        %585 = vmatprep.mubr.f32.mxu0 0.0
        %586 = vmatmul.mubr.f32.gmra.mrb[0].mxu0 %v388
        %v587 = vpop.f32.mrb[0].mxu0
        %v588 = vadd.f32 0.0, %v587
        %v589 = vpop.f32.mrb[0].mxu0
        %v590 = vadd.f32 0.0, %v589
        %591 = vmatprep.mubr.f32.mxu0 0.0
        %592 = vmatmul.mubr.f32.gmra.mrb[0].mxu0 %v391
        %v593 = vpop.f32.mrb[0].mxu0
        %v594 = vadd.f32 0.0, %v593
        %v595 = vpop.f32.mrb[0].mxu0
        %v596 = vadd.f32 0.0, %v595
        %597 = vmatprep.mubr.f32.mxu0 0.0
        %598 = vmatmul.mubr.f32.gmra.mrb[0].mxu0 %v394
        %v599 = vpop.f32.mrb[0].mxu0
        %v600 = vadd.f32 0.0, %v599
        %v601 = vpop.f32.mrb[0].mxu0
        %v602 = vadd.f32 0.0, %v601
        %603 = vmatprep.mubr.f32.mxu0 0.0
        %604 = vmatmul.mubr.f32.gmra.mrb[0].mxu0 %v397
        %v605 = vpop.f32.mrb[0].mxu0
        %v606 = vadd.f32 0.0, %v605
        %v607 = vpop.f32.mrb[0].mxu0
        %v608 = vadd.f32 0.0, %v607
        %609 = vmatprep.mubr.f32.mxu0 0.0
        %610 = vmatmul.mubr.f32.gmra.mrb[0].mxu0 %v400
        %v611 = vpop.f32.mrb[0].mxu0
        %v612 = vadd.f32 0.0, %v611
        %v613 = vpop.f32.mrb[0].mxu0
        %v614 = vadd.f32 0.0, %v613
        %615 = vmatprep.mubr.f32.mxu0 0.0
        %616 = vmatmul.mubr.f32.gmra.mrb[0].mxu0 %v403
        %v617 = vpop.f32.mrb[0].mxu0
        %v618 = vadd.f32 0.0, %v617
        %v619 = vpop.f32.mrb[0].mxu0
        %v620 = vadd.f32 0.0, %v619
        %621 = vmatprep.mubr.f32.mxu0 0.0
        %622 = vmatmul.mubr.f32.gmra.mrb[0].mxu0 %v406
        %v623 = vpop.f32.mrb[0].mxu0
        %v624 = vadd.f32 0.0, %v623
        %v625 = vpop.f32.mrb[0].mxu0
        %v626 = vadd.f32 0.0, %v625
        %627 = vmatprep.mubr.f32.mxu0 0.0
        %628 = vmatmul.mubr.f32.gmra.mrb[0].mxu0 %v409
        %v629 = vpop.f32.mrb[0].mxu0
        %v630 = vadd.f32 0.0, %v629
        %v631 = vpop.f32.mrb[0].mxu0
        %v632 = vadd.f32 0.0, %v631
        %633 = vmatprep.mubr.f32.mxu0 0.0
        %634 = vmatmul.mubr.f32.gmra.mrb[0].mxu0 %v412
        %v635 = vpop.f32.mrb[0].mxu0
        %v636 = vadd.f32 0.0, %v635
        %v637 = vpop.f32.mrb[0].mxu0
        %v638 = vadd.f32 0.0, %v637
        %639 = vmatprep.mubr.f32.mxu0 0.0
        %640 = vmatmul.mubr.f32.gmra.mrb[0].mxu0 %v415
        %v641 = vpop.f32.mrb[0].mxu0
        %v642 = vadd.f32 0.0, %v641
        %v643 = vpop.f32.mrb[0].mxu0
        %v644 = vadd.f32 0.0, %v643
        %645 = vmatprep.mubr.f32.mxu0 0.0
        %646 = vmatmul.mubr.f32.gmra.mrb[0].mxu0 %v418
        %v647 = vpop.f32.mrb[0].mxu0
        %v648 = vadd.f32 0.0, %v647
        %v649 = vpop.f32.mrb[0].mxu0
        %v650 = vadd.f32 0.0, %v649
        %651 = vmatprep.mubr.f32.mxu0 0.0
        %652 = vmatmul.mubr.f32.gmra.mrb[0].mxu0 %v421
        %v653 = vpop.f32.mrb[0].mxu0
        %v654 = vadd.f32 0.0, %v653
        %v655 = vpop.f32.mrb[0].mxu0
        %v656 = vadd.f32 0.0, %v655
        %657 = vmatprep.mubr.f32.mxu0 0.0
        %658 = vmatmul.mubr.f32.gmra.mrb[0].mxu0 %v424
        %v659 = vpop.f32.mrb[0].mxu0
        %v660 = vadd.f32 0.0, %v659
        %v661 = vpop.f32.mrb[0].mxu0
        %v662 = vadd.f32 0.0, %v661
        %663 = vmatprep.mubr.f32.mxu0 0.0
        %664 = vmatmul.mubr.f32.gmra.mrb[0].mxu0 %v427
        %v665 = vpop.f32.mrb[0].mxu0
        %v666 = vadd.f32 0.0, %v665
        %v667 = vpop.f32.mrb[0].mxu0
        %v668 = vadd.f32 0.0, %v667
        %669 = vmatprep.mubr.f32.mxu0 0.0
        %670 = vmatmul.mubr.f32.gmra.mrb[0].mxu0 %v430
        %v671 = vpop.f32.mrb[0].mxu0
        %v672 = vadd.f32 0.0, %v671
        %v673 = vpop.f32.mrb[0].mxu0
        %v674 = vadd.f32 0.0, %v673
        %675 = vmatprep.mubr.f32.mxu0 0.0
        %676 = vmatmul.mubr.f32.gmra.mrb[0].mxu0 %v433
        %v677 = vpop.f32.mrb[0].mxu0
        %v678 = vadd.f32 0.0, %v677
        %v679 = vpop.f32.mrb[0].mxu0
        %v680 = vadd.f32 0.0, %v679
        %681 = vdwg.mxu0
        %682 = vst [vmem:[%s332] sm:$0xff] %v576
        %683 = vst.msk [vmem:[%s332 + $0x8] sm:$0xff] %vm507, %v578
        %684 = vst [vmem:[%s332 + $0x10] sm:$0xff] %v582
        %685 = vst.msk [vmem:[%s332 + $0x18] sm:$0xff] %vm507, %v584
        %686 = vst [vmem:[%s332 + $0x20] sm:$0xff] %v588
        %687 = vst.msk [vmem:[%s332 + $0x28] sm:$0xff] %vm507, %v590
        %688 = vst [vmem:[%s332 + $0x30] sm:$0xff] %v594
        %689 = vst.msk [vmem:[%s332 + $0x38] sm:$0xff] %vm507, %v596
        %690 = vst [vmem:[%s332 + $0x40] sm:$0xff] %v600
        %691 = vst.msk [vmem:[%s332 + $0x48] sm:$0xff] %vm507, %v602
        %692 = vst [vmem:[%s332 + $0x50] sm:$0xff] %v606
        %693 = vst.msk [vmem:[%s332 + $0x58] sm:$0xff] %vm507, %v608
        %694 = vst [vmem:[%s332 + $0x60] sm:$0xff] %v612
        %695 = vst.msk [vmem:[%s332 + $0x68] sm:$0xff] %vm507, %v614
        %696 = vst [vmem:[%s332 + $0x70] sm:$0xff] %v618
        %697 = vst.msk [vmem:[%s332 + $0x78] sm:$0xff] %vm507, %v620
        %698 = vst [vmem:[%s332 + $0x80] sm:$0xff] %v624
        %699 = vst.msk [vmem:[%s332 + $0x88] sm:$0xff] %vm507, %v626
        %700 = vst [vmem:[%s332 + $0x90] sm:$0xff] %v630
        %701 = vst.msk [vmem:[%s332 + $0x98] sm:$0xff] %vm507, %v632
        %702 = vst [vmem:[%s332 + $0xa0] sm:$0xff] %v636
        %703 = vst.msk [vmem:[%s332 + $0xa8] sm:$0xff] %vm507, %v638
        %704 = vst [vmem:[%s332 + $0xb0] sm:$0xff] %v642
        %705 = vst.msk [vmem:[%s332 + $0xb8] sm:$0xff] %vm507, %v644
        %706 = vst [vmem:[%s332 + $0xc0] sm:$0xff] %v648
        %707 = vst.msk [vmem:[%s332 + $0xc8] sm:$0xff] %vm507, %v650
        %708 = vst [vmem:[%s332 + $0xd0] sm:$0xff] %v654
        %709 = vst.msk [vmem:[%s332 + $0xd8] sm:$0xff] %vm507, %v656
        %710 = vst [vmem:[%s332 + $0xe0] sm:$0xff] %v660
        %711 = vst.msk [vmem:[%s332 + $0xe8] sm:$0xff] %vm507, %v662
        %712 = vst [vmem:[%s332 + $0xf0] sm:$0xff] %v666
        %713 = vst.msk [vmem:[%s332 + $0xf8] sm:$0xff] %vm507, %v668
        %714 = vst [vmem:[%s332 + $0x100] sm:$0xff] %v672
        %715 = vst.msk [vmem:[%s332 + $0x108] sm:$0xff] %vm507, %v674
        %716 = vst [vmem:[%s332 + $0x110] sm:$0xff] %v678
        %717 = vst.msk [vmem:[%s332 + $0x118] sm:$0xff] %vm507, %v680
        %v718 = vld [vmem:[%s3] sm:$0xff]
        %v720 = vsel %vm377, %v718, 0
        %v723 = vsel %vm377, %v358, 0
        %v726 = vsel %vm377, %v359, 0
        %v729 = vsel %vm377, %v360, 0
        %v732 = vsel %vm377, %v361, 0
        %v735 = vsel %vm377, %v362, 0
        %v738 = vsel %vm377, %v363, 0
        %v741 = vsel %vm377, %v364, 0
        %v744 = vsel %vm377, %v365, 0
        %v747 = vsel %vm377, %v366, 0
        %v750 = vsel %vm377, %v367, 0
        %v753 = vsel %vm377, %v368, 0
        %v756 = vsel %vm377, %v369, 0
        %v759 = vsel %vm377, %v370, 0
        %v762 = vsel %vm377, %v371, 0
        %v765 = vsel %vm377, %v372, 0
        %v768 = vsel %vm377, %v373, 0
        %v771 = vsel %vm377, %v374, 0
        %v774 = vsel %vm377, %v375, 0
        %776 = vmatprep.subr.mxu0 0.0
        %777 = vmatpush1.xpose.msra.mxu0 %v723
        %778 = vmatprep.subr.mxu0 0.0
        %779 = vmatpush1.xpose.msra.mxu0 %v726
        %780 = vmatprep.subr.mxu0 0.0
        %781 = vmatpush1.xpose.msra.mxu0 %v729
        %782 = vmatprep.subr.mxu0 0.0
        %783 = vmatpush1.xpose.msra.mxu0 %v732
        %784 = vmatprep.subr.mxu0 0.0
        %785 = vmatpush1.xpose.msra.mxu0 %v735
        %786 = vmatprep.subr.mxu0 0.0
        %787 = vmatpush1.xpose.msra.mxu0 %v738
        %788 = vmatprep.subr.mxu0 0.0
        %789 = vmatpush1.xpose.msra.mxu0 %v741
        %790 = vmatprep.subr.mxu0 0.0
        %791 = vmatpush1.xpose.msra.mxu0 %v744
        %792 = vmatprep.subr.mxu0 0.0
        %793 = vmatpush1.xpose.msra.mxu0 %v747
        %794 = vmatprep.subr.mxu0 0.0
        %795 = vmatpush1.xpose.msra.mxu0 %v750
        %796 = vmatprep.subr.mxu0 0.0
        %797 = vmatpush1.xpose.msra.mxu0 %v753
        %798 = vmatprep.subr.mxu0 0.0
        %799 = vmatpush1.xpose.msra.mxu0 %v756
        %800 = vmatprep.subr.mxu0 0.0
        %801 = vmatpush1.xpose.msra.mxu0 %v759
        %802 = vmatprep.subr.mxu0 0.0
        %803 = vmatpush1.xpose.msra.mxu0 %v762
        %804 = vmatprep.subr.mxu0 0.0
        %805 = vmatpush1.xpose.msra.mxu0 %v765
        %806 = vmatprep.subr.mxu0 0.0
        %807 = vmatpush1.xpose.msra.mxu0 %v768
        %808 = vmatprep.subr.mxu0 0.0
        %809 = vmatpush1.xpose.msra.mxu0 %v771
        %810 = vmatprep.subr.mxu0 0.0
        %811 = vmatpush1.xpose.msra.mxu0 %v774
        %812 = vmatprep.subr.mxu0 0.0
        %813 = vmatpush1.xpose.msra.mxu0 0.0
        %814 = vmatprep.subr.mxu0 0.0
        %815 = vmatpush1.xpose.msra.mxu0 0.0
        %816 = vmatprep.subr.mxu0 0.0
        %817 = vmatpush1.xpose.msra.mxu0 0.0
        %818 = vmatprep.subr.mxu0 0.0
        %819 = vmatpush1.xpose.msra.mxu0 0.0
        %820 = vmatprep.subr.mxu0 0.0
        %821 = vmatpush1.xpose.msra.mxu0 0.0
        %822 = vmatprep.subr.mxu0 0.0
        %823 = vmatpush1.xpose.msra.mxu0 0.0
        %824 = vmatprep.subr.mxu0 0.0
        %825 = vmatpush1.xpose.msra.mxu0 0.0
        %826 = vmatprep.subr.mxu0 0.0
        %827 = vmatpush1.xpose.msra.mxu0 0.0
        %828 = vmatprep.subr.mxu0 0.0
        %829 = vmatpush1.xpose.msra.mxu0 0.0
        %830 = vmatprep.subr.mxu0 0.0
        %831 = vmatpush1.xpose.msra.mxu0 0.0
        %832 = vmatprep.subr.mxu0 0.0
        %833 = vmatpush1.xpose.msra.mxu0 0.0
        %834 = vmatprep.subr.mxu0 0.0
        %835 = vmatpush1.xpose.msra.mxu0 0.0
        %836 = vmatprep.subr.mxu0 0.0
        %837 = vmatpush1.xpose.msra.mxu0 0.0
        %838 = vmatprep.subr.mxu0 0.0
        %839 = vmatpush1.xpose.msra.mxu0 0.0
        %840 = vmatprep.mubr.f32.mxu0 0.0
        %841 = vmatmul.mubr.f32.gmra.mrb[0].mxu0 %v720
        %v842 = vpop.f32.mrb[0].mxu0
        %v843 = vadd.f32 0.0, %v842
        %v844 = vpop.f32.mrb[0].mxu0
        %v845 = vadd.f32 0.0, %v844
        %846 = vdwg.mxu0
        %847 = vst [vmem:[%s339] sm:$0xff] %v843
        %848 = vst.msk [vmem:[%s339 + $0x8] sm:$0xff] %vm507, %v845
        %s849 = sand.u32 %s132, 1
        %s850 = scalar_lea.sflag [#allocation4], %s849
        %s851 = sand.u32 %s132, 1
        %s852 = smul.addr %s851, 16
        %s853 = scalar_lea.vmem [#allocation8], %s852
        %s854 = sand.u32 %s30, 1
        %s855 = scalar_lea.sflag [#allocation10], %s854
        %s856 = sand.u32 %s158, 1
        %s857 = smul.addr %s856, 288
        %s858 = scalar_lea.vmem [#allocation9], %s857
        %s859 = sand.u32 %s30, 1
        %s860 = scalar_lea.sflag [#allocation10], %s859
        %s861 = sand.u32 %s184, 1
        %s862 = smul.addr %s861, 16
        %s863 = scalar_lea.vmem [#allocation11], %s862
        // Predicated region
        $region49: #{tpu_custom_call.1} parent=35 // pred_check
          %p864 = pneg %p142
        $region50: #{tpu_custom_call.1} parent=35 // pred_check_branch
          %866 = sbr.rel (%p864) target = $region52
        $region51: #{tpu_custom_call.1} parent=35 // pred_region
          %s868 = ssub.s32 256, 256
          %869 = vsyncadd %s850, %s868
          %s870 = smul.addr %s30, 2
          %s871 = smul.addr %s870, 128
          %s872 = scalar_lea.hbm %s4, %s871
          %s874 = sshll.u32 %s853, 4
          %s875 = int_to_ptr.vmem [resolvable:$true] %s874
          %877 = dma.vmem_to_hbm [thread:$0]  %s875, 256, %s872, %s850
        $region52: #{tpu_custom_call.1} parent=35 // pred_fallthru
          _
        // Predicated region
        $region53: #{tpu_custom_call.1} parent=35 // pred_check
          %p878 = pneg %p168
        $region54: #{tpu_custom_call.1} parent=35 // pred_check_branch
          %880 = sbr.rel (%p878) target = $region56
        $region55: #{tpu_custom_call.1} parent=35 // pred_region
          %s882 = ssub.s32 4608, 4608
          %883 = vsyncadd %s855, %s882
          %s884 = smul.addr %s30, 36
          %s885 = smul.addr %s884, 128
          %s886 = scalar_lea.hbm %s5, %s885
          %s887 = sshll.u32 %s858, 4
          %s888 = int_to_ptr.vmem [resolvable:$true] %s887
          %893 = dma.vmem_to_hbm [thread:$0]  %s888, 4608, %s886, %s855, 256, 256, 16
        $region56: #{tpu_custom_call.1} parent=35 // pred_fallthru
          _
        // Predicated region
        $region57: #{tpu_custom_call.1} parent=35 // pred_check
          %p894 = pneg %p194
        $region58: #{tpu_custom_call.1} parent=35 // pred_check_branch
          %896 = sbr.rel (%p894) target = $region60
        $region59: #{tpu_custom_call.1} parent=35 // pred_region
          %s898 = ssub.s32 256, 256
          %899 = vsyncadd %s860, %s898
          %s900 = smul.addr %s30, 2
          %s901 = smul.addr %s900, 128
          %s902 = scalar_lea.hbm %s6, %s901
          %s904 = sshll.u32 %s863, 4
          %s905 = int_to_ptr.vmem [resolvable:$true] %s904
          %907 = dma.vmem_to_hbm [thread:$0]  %s905, 256, %s902, %s860
        $region60: #{tpu_custom_call.1} parent=35 // pred_fallthru
          _
      $region36: #{tpu_custom_call.1} parent=5 // pred_fallthru
        _
      %p908 = scmp.le.s32.totalorder 2, %s25
      // Predicated region
      $region61: #{tpu_custom_call.1} parent=5 // pred_check
        %p909 = pneg %p908
      $region62: #{tpu_custom_call.1} parent=5 // pred_check_branch
        %911 = sbr.rel (%p909) target = $region64
      $region63: #{tpu_custom_call.1} parent=5 // pred_region
        %s912 = ssub.s32 %s25, 2
        // Predicated region
        $region65: #{tpu_custom_call.1} parent=63 // pred_check
          %p913 = pneg %p148
        $region66: #{tpu_custom_call.1} parent=63 // pred_check_branch
          %915 = sbr.rel (%p913) target = $region68
        $region67: #{tpu_custom_call.1} parent=63 // pred_region
          %s916 = sand.u32 %s133, 1
          %s917 = scalar_lea.sflag [#allocation4], %s916
          %s918 = sand.u32 %s133, 1
          %s919 = smul.addr %s918, 16
          %s920 = scalar_lea.vmem [#allocation8], %s919
          %921 = dma.done %s917, 256
        $region68: #{tpu_custom_call.1} parent=63 // pred_fallthru
          _
        // Predicated region
        $region69: #{tpu_custom_call.1} parent=63 // pred_check
          %p922 = pneg %p174
        $region70: #{tpu_custom_call.1} parent=63 // pred_check_branch
          %924 = sbr.rel (%p922) target = $region72
        $region71: #{tpu_custom_call.1} parent=63 // pred_region
          %s925 = sand.u32 %s31, 1
          %s926 = scalar_lea.sflag [#allocation10], %s925
          %s927 = sand.u32 %s159, 1
          %s928 = smul.addr %s927, 288
          %s929 = scalar_lea.vmem [#allocation9], %s928
          %930 = dma.done %s926, 4608
        $region72: #{tpu_custom_call.1} parent=63 // pred_fallthru
          _
        // Predicated region
        $region73: #{tpu_custom_call.1} parent=63 // pred_check
          %p931 = pneg %p200
        $region74: #{tpu_custom_call.1} parent=63 // pred_check_branch
          %933 = sbr.rel (%p931) target = $region76
        $region75: #{tpu_custom_call.1} parent=63 // pred_region
          %s934 = sand.u32 %s31, 1
          %s935 = scalar_lea.sflag [#allocation10], %s934
          %s936 = sand.u32 %s185, 1
          %s937 = smul.addr %s936, 16
          %s938 = scalar_lea.vmem [#allocation11], %s937
          %939 = dma.done %s935, 256
        $region76: #{tpu_custom_call.1} parent=63 // pred_fallthru
          _
      $region64: #{tpu_custom_call.1} parent=5 // pred_fallthru
        _
    $region6: #{tpu_custom_call.1} parent=1 // loop_footer
      %s29 = sadd.s32 1, %s25
    $region7: #{tpu_custom_call.1} parent=1 // loop_footer_branch
      %24 = sbr.rel target = $region3
    $region8: #{tpu_custom_call.1} parent=1 // loop_exit
      _
    %940 = vsyncpa [#allocation3], 1
    %s941 = scalar_lea.sflag [#allocation3], 1
    %942 = vsyncpa %s941, 1
    %943 = vsyncpa [#allocation6], 1
    %s944 = scalar_lea.sflag [#allocation6], 1
    %945 = vsyncpa %s944, 1
    %946 = vsyncpa [#allocation4], 1
    %s947 = scalar_lea.sflag [#allocation4], 1
    %948 = vsyncpa %s947, 1
    %949 = vsyncpa [#allocation10], 1
    %s950 = scalar_lea.sflag [#allocation10], 1
    %951 = vsyncpa %s950, 1

</llo_original>
